<compile_context>
chip_gen: v5e
topology: v5e:2x2
jax: 0.10.0
libtpu: 0.0.40
codegen_flags: <defaults>
</compile_context>

<pallas_src>
import functools

import jax
import jax.numpy as jnp
from jax.experimental import pallas as pl
from jax.experimental.pallas import tpu as pltpu


# ---------------------------------------------------------------------------
# Glue: adjacency normalization (get_degree) and deterministic parameter init
# ---------------------------------------------------------------------------
def get_degree(A, symmetric=True):
    A = A + jnp.eye(A.shape[0], dtype=A.dtype)
    d = A.sum(axis=-1)
    if symmetric:
        D = jnp.diag(jnp.power(d, -0.5))
        return D @ A @ D
    else:
        D = jnp.diag(jnp.power(d, -1.0))
        return D @ A


def xavier_uniform(key, fan_out, fan_in, dtype=jnp.float32):
    # matches nn.init.xavier_uniform_ (gain=1) on a [fan_out, fan_in] weight
    limit = jnp.sqrt(6.0 / (fan_in + fan_out))
    return jax.random.uniform(key, (fan_out, fan_in), dtype, minval=-limit, maxval=limit)


# ---------------------------------------------------------------------------
# Pallas kernel
#   grid = (num_layers, num_row_tiles); layer axis outer, row-tile axis inner.
#   a_ref  : (tm, N)      bf16   row tile of A_norm (re-streamed per layer)
#   x_ref  : (N, F)       bf16   padded input features (resident, block idx constant)
#   w_ref  : (1, F, F)    bf16   this layer's padded, pre-transposed weight
#   b_ref  : (1, 1, F)    f32    this layer's padded bias
#   o_ref  : (1, tm, F)   f32    per-layer output slab (layer `num_layers-1` is the answer)
#   h0/h1  : (N, F)       bf16   ping-pong activation scratch (all nodes)
#   proj   : (N, F)       bf16   cached  h_prev @ W_l  for the current layer
# ---------------------------------------------------------------------------
def gcn_kernel(a_ref, x_ref, w_ref, b_ref, o_ref, h0_ref, h1_ref, proj_ref):
    l = pl.program_id(0)          # layer index
    r = pl.program_id(1)          # node-row tile index
    tm = a_ref.shape[0]

    # Once per layer (first row tile): project ALL nodes' activations through W_l.
    # Reorder A @ (h @ W): the N^2-sized matmul below then uses the smaller width.
    @pl.when(r == 0)
    def _():
        prev = jnp.where(l % 2 == 1, h0_ref[...], h1_ref[...])   # layer l reads buf (l-1)%2
        h_in = jnp.where(l == 0, x_ref[...], prev)               # layer 0 reads x
        proj_ref[...] = jnp.dot(
            h_in, w_ref[0], preferred_element_type=jnp.float32
        ).astype(proj_ref.dtype)

    # Row tile of  A @ (h @ W_l)  -- bf16 MXU operands, f32 accumulation.
    z = jnp.dot(a_ref[...], proj_ref[...], preferred_element_type=jnp.float32)
    h_new = jnp.tanh(z + b_ref[0])                               # f32 bias + tanh (VPU/EUP)

    # Lane-dense (128-wide) unmasked store of this layer's row tile.
    o_ref[0] = h_new.astype(o_ref.dtype)

    # Persist activations for the next layer in the ping-pong scratch (bf16).
    hv = h_new.astype(h0_ref.dtype)
    row0 = pl.multiple_of(r * tm, tm)

    @pl.when(l % 2 == 0)
    def _():
        h0_ref[pl.ds(row0, tm), :] = hv

    @pl.when(l % 2 == 1)
    def _():
        h1_ref[pl.ds(row0, tm), :] = hv


# ---------------------------------------------------------------------------
# Wrapper: pad to lane-dense shapes, pack weight/bias slabs, set up the grid.
# ---------------------------------------------------------------------------
def gcn_forward(A_norm, x, params, *, tm=16):
    """params = ((W1,b1),(W2,b2),(W3,b3)) with W_i in PyTorch [out, in] layout."""
    (w1, b1), (w2, b2), (w3, b3) = params
    N, in_dim = x.shape
    out_dim = w3.shape[0]
    num_layers = 3

    # common padded feature width (multiple of 128 lanes)
    F = 128 * ((max(in_dim, w1.shape[0], w2.shape[0], out_dim) + 127) // 128)
    assert N % tm == 0, "pad node count to a multiple of tm"
    assert tm % 16 == 0, "tm must be a multiple of 16 (bf16 sublane packing)"
    num_tiles = N // tm

    def pad2(a, rows, cols):
        return jnp.pad(a, ((0, rows - a.shape[0]), (0, cols - a.shape[1])))

    # weights pre-transposed to [in, out] and zero-padded to [F, F]; packed into one slab
    w_slab = jnp.stack(
        [pad2(w1.T, F, F), pad2(w2.T, F, F), pad2(w3.T, F, F)]
    ).astype(jnp.bfloat16)
    b_slab = jnp.stack(
        [jnp.pad(b, (0, F - b.shape[0])) for b in (b1, b2, b3)]
    ).reshape(num_layers, 1, F).astype(jnp.float32)

    # bf16 MXU operands (accumulation stays f32 inside the kernel)
    A_bf = A_norm.astype(jnp.bfloat16)
    x_bf = pad2(x, N, F).astype(jnp.bfloat16)

    out = pl.pallas_call(
        gcn_kernel,
        out_shape=jax.ShapeDtypeStruct((num_layers, N, F), jnp.float32),
        grid_spec=pltpu.PrefetchScalarGridSpec(
            num_scalar_prefetch=0,
            grid=(num_layers, num_tiles),
            in_specs=[
                pl.BlockSpec((tm, N), lambda l, r: (r, 0)),        # A row tile
                pl.BlockSpec((N, F), lambda l, r: (0, 0)),          # x (resident)
                pl.BlockSpec((1, F, F), lambda l, r: (l, 0, 0)),    # W_l
                pl.BlockSpec((1, 1, F), lambda l, r: (l, 0, 0)),    # b_l
            ],
            out_specs=pl.BlockSpec((1, tm, F), lambda l, r: (l, r, 0)),
            scratch_shapes=[
                pltpu.VMEM((N, F), jnp.bfloat16),   # h ping
                pltpu.VMEM((N, F), jnp.bfloat16),   # h pong
                pltpu.VMEM((N, F), jnp.bfloat16),   # cached h_prev @ W_l
            ],
        ),
        compiler_params=pltpu.CompilerParams(
            dimension_semantics=("arbitrary", "arbitrary"),
        ),
    )(A_bf, x_bf, w_slab, b_slab)

    # last layer, strip lane padding
    return out[num_layers - 1, :, :out_dim]


# ---------------------------------------------------------------------------
# Pure-JAX references
# ---------------------------------------------------------------------------
def gcn_reference(A_norm, x, params):
    """Mirrors the PyTorch forward exactly (f32, original op order)."""
    (w1, b1), (w2, b2), (w3, b3) = params
    h = A_norm @ x
    h = jnp.tanh(h @ w1.T + b1)
    h = A_norm @ h
    h = jnp.tanh(h @ w2.T + b2)
    h = A_norm @ h
    h = jnp.tanh(h @ w3.T + b3)
    return h


def gcn_reference_bf16(A_norm, x, params):
    """Mirrors the kernel's numerics (bf16 operands, f32 accum, reordered A @ (h @ W))."""
    bf = jnp.bfloat16
    A = A_norm.astype(bf)
    h = x.astype(bf)
    hf = None
    for (w, b) in params:
        proj = jnp.dot(h, w.T.astype(bf), preferred_element_type=jnp.float32).astype(bf)
        z = jnp.dot(A, proj, preferred_element_type=jnp.float32) + b.astype(jnp.float32)
        hf = jnp.tanh(z)
        h = hf.astype(bf)
    return hf


if __name__ == "__main__":
    key = jax.random.PRNGKey(0)
    k_adj, k_x, k1, k2, k3 = jax.random.split(key, 5)

    # small shapes implied by the module
    N = 32          # number of graph nodes (multiple of tm=16)
    in_dim = 32
    hidden1 = in_dim // 2        # 16
    hidden2 = hidden1 // 2       # 8
    out_dim = 4

    # random symmetric 0/1 adjacency (no self loops; get_degree adds I)
    raw = (jax.random.uniform(k_adj, (N, N)) < 0.3).astype(jnp.float32)
    adj = jnp.triu(raw, 1)
    adj = adj + adj.T
    A_norm = get_degree(adj, symmetric=True).astype(jnp.float32)

    x = jax.random.normal(k_x, (N, in_dim), dtype=jnp.float32)

    # deterministic xavier-uniform weights ([out, in], PyTorch layout), zero biases
    params = (
        (xavier_uniform(k1, hidden1, in_dim),  jnp.zeros((hidden1,), jnp.float32)),
        (xavier_uniform(k2, hidden2, hidden1), jnp.zeros((hidden2,), jnp.float32)),
        (xavier_uniform(k3, out_dim, hidden2), jnp.zeros((out_dim,), jnp.float32)),
    )

    out = jax.block_until_ready(gcn_forward(A_norm, x, params, tm=16))
    assert out.shape == (N, out_dim)

    # tight check vs. a reference that mimics the kernel's bf16-operand numerics
    ref_bf = gcn_reference_bf16(A_norm, x, params)
    err_bf = jnp.max(jnp.abs(out - ref_bf))
    assert jnp.allclose(out, ref_bf, atol=5e-3, rtol=5e-3), f"bf16-ref mismatch {err_bf}"

    # looser check vs. the exact f32 PyTorch-equivalent forward (bf16 operand rounding)
    ref = gcn_reference(A_norm, x, params)
    err = jnp.max(jnp.abs(out - ref))
    assert jnp.allclose(out, ref, atol=3e-2, rtol=3e-2), f"f32-ref mismatch {err}"

    print("KERNEL_OK")
</pallas_src>

<mosaic_0001>
module attributes {stable_mosaic.version = 11 : i64} {
  func.func @gcn_kernel(%arg0: i32, %arg1: i32, %arg2: memref<16x32xbf16, #tpu.memory_space<vmem>>, %arg3: memref<32x128xbf16, #tpu.memory_space<vmem>>, %arg4: memref<1x128x128xbf16, #tpu.memory_space<vmem>>, %arg5: memref<1x1x128xf32, #tpu.memory_space<vmem>>, %arg6: memref<1x16x128xf32, #tpu.memory_space<vmem>>, %arg7: memref<32x128xbf16, #tpu.memory_space<vmem>>, %arg8: memref<32x128xbf16, #tpu.memory_space<vmem>>, %arg9: memref<32x128xbf16, #tpu.memory_space<vmem>>) attributes {dimension_semantics = [#tpu.dimension_semantics<arbitrary>, #tpu.dimension_semantics<arbitrary>], iteration_bounds = array<i64: 3, 2>, scalar_prefetch = 0 : i64, scratch_operands = 3 : i64, tpu.core_type = #tpu.core_type<tc>, window_params = [{transform_indices = @transform_0, window_bounds = array<i64: 16, 32>}, {pipeline_mode = #tpu.pipeline_mode<synchronous>, transform_indices = @transform_1, window_bounds = array<i64: 32, 128>}, {transform_indices = @transform_2, window_bounds = array<i64: 1, 128, 128>}, {transform_indices = @transform_3, window_bounds = array<i64: 1, 1, 128>}, {transform_indices = @transform_4, window_bounds = array<i64: 1, 16, 128>}]} {
    %c0_i32 = arith.constant 0 : i32
    %0 = arith.cmpi eq, %arg1, %c0_i32 : i32
    %1 = arith.extui %0 : i1 to i32
    %c0_i32_0 = arith.constant 0 : i32
    %2 = arith.cmpi ne, %1, %c0_i32_0 : i32
    scf.if %2 {
      %c2_i32_24 = arith.constant 2 : i32
      %c0_i32_25 = arith.constant 0 : i32
      %43 = arith.cmpi eq, %c2_i32_24, %c0_i32_25 : i32
      %c1_i32_26 = arith.constant 1 : i32
      %44 = arith.select %43, %c1_i32_26, %c2_i32_24 : i32
      %45 = arith.remsi %arg0, %44 : i32
      %c0_i32_27 = arith.constant 0 : i32
      %46 = arith.cmpi ne, %45, %c0_i32_27 : i32
      %c0_i32_28 = arith.constant 0 : i32
      %47 = arith.cmpi slt, %45, %c0_i32_28 : i32
      %c0_i32_29 = arith.constant 0 : i32
      %48 = arith.cmpi slt, %44, %c0_i32_29 : i32
      %49 = arith.xori %47, %48 : i1
      %50 = arith.andi %49, %46 : i1
      %51 = arith.addi %45, %44 : i32
      %52 = arith.select %50, %51, %45 : i32
      %c1_i32_30 = arith.constant 1 : i32
      %53 = arith.cmpi eq, %52, %c1_i32_30 : i32
      %c0_31 = arith.constant 0 : index
      %c0_32 = arith.constant 0 : index
      %54 = vector.load %arg7[%c0_31, %c0_32] : memref<32x128xbf16, #tpu.memory_space<vmem>>, vector<32x128xbf16>
      %c0_33 = arith.constant 0 : index
      %c0_34 = arith.constant 0 : index
      %55 = vector.load %arg8[%c0_33, %c0_34] : memref<32x128xbf16, #tpu.memory_space<vmem>>, vector<32x128xbf16>
      %56 = arith.select %53, %54, %55 : vector<32x128xbf16>
      %c0_i32_35 = arith.constant 0 : i32
      %57 = arith.cmpi eq, %arg0, %c0_i32_35 : i32
      %c0_36 = arith.constant 0 : index
      %c0_37 = arith.constant 0 : index
      %58 = vector.load %arg3[%c0_36, %c0_37] : memref<32x128xbf16, #tpu.memory_space<vmem>>, vector<32x128xbf16>
      %59 = arith.select %57, %58, %56 : vector<32x128xbf16>
      %c0_38 = arith.constant 0 : index
      %c0_39 = arith.constant 0 : index
      %c0_40 = arith.constant 0 : index
      %60 = vector.load %arg4[%c0_38, %c0_39, %c0_40] : memref<1x128x128xbf16, #tpu.memory_space<vmem>>, vector<1x128x128xbf16>
      %61 = vector.shape_cast %60 : vector<1x128x128xbf16> to vector<128x128xbf16>
      %cst_41 = arith.constant dense<0.000000e+00> : vector<32x128xf32>
      %62 = tpu.matmul %59, %61, %cst_41 {dimension_numbers = #tpu.dot_dimension_numbers<[1], [0], [0], [1], [0, 0, 1, 1], [], []>} : vector<32x128xbf16>, vector<128x128xbf16>, vector<32x128xf32> -> vector<32x128xf32>
      %63 = arith.truncf %62 : vector<32x128xf32> to vector<32x128xbf16>
      %c0_42 = arith.constant 0 : index
      %c0_43 = arith.constant 0 : index
      %64 = vector.load %arg9[%c0_42, %c0_43] : memref<32x128xbf16, #tpu.memory_space<vmem>>, vector<32x128xbf16>
      tpu.vector_store %arg9[%c0_42, %c0_43], %63 {strides = array<i32>} : memref<32x128xbf16, #tpu.memory_space<vmem>>, vector<32x128xbf16>,
    } else {
    }
    %c0 = arith.constant 0 : index
    %c0_1 = arith.constant 0 : index
    %3 = vector.load %arg2[%c0, %c0_1] : memref<16x32xbf16, #tpu.memory_space<vmem>>, vector<16x32xbf16>
    %c0_2 = arith.constant 0 : index
    %c0_3 = arith.constant 0 : index
    %4 = vector.load %arg9[%c0_2, %c0_3] : memref<32x128xbf16, #tpu.memory_space<vmem>>, vector<32x128xbf16>
    %cst = arith.constant dense<0.000000e+00> : vector<16x128xf32>
    %5 = tpu.matmul %3, %4, %cst {dimension_numbers = #tpu.dot_dimension_numbers<[1], [0], [0], [1], [0, 0, 1, 1], [], []>} : vector<16x32xbf16>, vector<32x128xbf16>, vector<16x128xf32> -> vector<16x128xf32>
    %c0_4 = arith.constant 0 : index
    %c0_5 = arith.constant 0 : index
    %c0_6 = arith.constant 0 : index
    %6 = vector.load %arg5[%c0_4, %c0_5, %c0_6] : memref<1x1x128xf32, #tpu.memory_space<vmem>>, vector<1x1x128xf32>
    %7 = vector.shape_cast %6 : vector<1x1x128xf32> to vector<1x128xf32>
    %8 = vector.broadcast %7 : vector<1x128xf32> to vector<16x128xf32>
    %9 = arith.addf %5, %8 : vector<16x128xf32>
    %10 = math.tanh %9 : vector<16x128xf32>
    %c0_7 = arith.constant 0 : index
    %c0_8 = arith.constant 0 : index
    %c0_9 = arith.constant 0 : index
    %11 = vector.load %arg6[%c0_7, %c0_8, %c0_9] : memref<1x16x128xf32, #tpu.memory_space<vmem>>, vector<1x16x128xf32>
    %12 = vector.shape_cast %11 : vector<1x16x128xf32> to vector<16x128xf32>
    %13 = vector.shape_cast %10 : vector<16x128xf32> to vector<1x16x128xf32>
    tpu.vector_store %arg6[%c0_7, %c0_8, %c0_9], %13 {strides = array<i32>} : memref<1x16x128xf32, #tpu.memory_space<vmem>>, vector<1x16x128xf32>,
    %14 = arith.truncf %10 : vector<16x128xf32> to vector<16x128xbf16>
    %c16_i32 = arith.constant 16 : i32
    %15 = arith.muli %arg1, %c16_i32 : i32
    %16 = tpu.assume_multiple %15, 16 : i32
    %c2_i32 = arith.constant 2 : i32
    %c0_i32_10 = arith.constant 0 : i32
    %17 = arith.cmpi eq, %c2_i32, %c0_i32_10 : i32
    %c1_i32 = arith.constant 1 : i32
    %18 = arith.select %17, %c1_i32, %c2_i32 : i32
    %19 = arith.remsi %arg0, %18 : i32
    %c0_i32_11 = arith.constant 0 : i32
    %20 = arith.cmpi ne, %19, %c0_i32_11 : i32
    %c0_i32_12 = arith.constant 0 : i32
    %21 = arith.cmpi slt, %19, %c0_i32_12 : i32
    %c0_i32_13 = arith.constant 0 : i32
    %22 = arith.cmpi slt, %18, %c0_i32_13 : i32
    %23 = arith.xori %21, %22 : i1
    %24 = arith.andi %23, %20 : i1
    %25 = arith.addi %19, %18 : i32
    %26 = arith.select %24, %25, %19 : i32
    %c0_i32_14 = arith.constant 0 : i32
    %27 = arith.cmpi eq, %26, %c0_i32_14 : i32
    %28 = arith.extui %27 : i1 to i32
    %c0_i32_15 = arith.constant 0 : i32
    %29 = arith.cmpi ne, %28, %c0_i32_15 : i32
    scf.if %29 {
      %43 = arith.index_cast %16 : i32 to index
      %c0_24 = arith.constant 0 : index
      %44 = vector.load %arg7[%43, %c0_24] : memref<32x128xbf16, #tpu.memory_space<vmem>>, vector<16x128xbf16>
      tpu.vector_store %arg7[%43, %c0_24], %14 {strides = array<i32>} : memref<32x128xbf16, #tpu.memory_space<vmem>>, vector<16x128xbf16>,
    } else {
    }
    %c2_i32_16 = arith.constant 2 : i32
    %c0_i32_17 = arith.constant 0 : i32
    %30 = arith.cmpi eq, %c2_i32_16, %c0_i32_17 : i32
    %c1_i32_18 = arith.constant 1 : i32
    %31 = arith.select %30, %c1_i32_18, %c2_i32_16 : i32
    %32 = arith.remsi %arg0, %31 : i32
    %c0_i32_19 = arith.constant 0 : i32
    %33 = arith.cmpi ne, %32, %c0_i32_19 : i32
    %c0_i32_20 = arith.constant 0 : i32
    %34 = arith.cmpi slt, %32, %c0_i32_20 : i32
    %c0_i32_21 = arith.constant 0 : i32
    %35 = arith.cmpi slt, %31, %c0_i32_21 : i32
    %36 = arith.xori %34, %35 : i1
    %37 = arith.andi %36, %33 : i1
    %38 = arith.addi %32, %31 : i32
    %39 = arith.select %37, %38, %32 : i32
    %c1_i32_22 = arith.constant 1 : i32
    %40 = arith.cmpi eq, %39, %c1_i32_22 : i32
    %41 = arith.extui %40 : i1 to i32
    %c0_i32_23 = arith.constant 0 : i32
    %42 = arith.cmpi ne, %41, %c0_i32_23 : i32
    scf.if %42 {
      %43 = arith.index_cast %16 : i32 to index
      %c0_24 = arith.constant 0 : index
      %44 = vector.load %arg8[%43, %c0_24] : memref<32x128xbf16, #tpu.memory_space<vmem>>, vector<16x128xbf16>
      tpu.vector_store %arg8[%43, %c0_24], %14 {strides = array<i32>} : memref<32x128xbf16, #tpu.memory_space<vmem>>, vector<16x128xbf16>,
    } else {
    }
    return
  }
  func.func @transform_0(%arg0: i32, %arg1: i32) -> (i32, i32) {
    %c0_i32 = arith.constant 0 : i32
    %c0_i32_0 = arith.constant 0 : i32
    return %arg1, %c0_i32 : i32, i32
  }
  func.func @transform_1(%arg0: i32, %arg1: i32) -> (i32, i32) {
    %c0_i32 = arith.constant 0 : i32
    %c0_i32_0 = arith.constant 0 : i32
    %c0_i32_1 = arith.constant 0 : i32
    return %c0_i32, %c0_i32_0 : i32, i32
  }
  func.func @transform_2(%arg0: i32, %arg1: i32) -> (i32, i32, i32) {
    %c0_i32 = arith.constant 0 : i32
    %c0_i32_0 = arith.constant 0 : i32
    %c0_i32_1 = arith.constant 0 : i32
    return %arg0, %c0_i32, %c0_i32_0 : i32, i32, i32
  }
  func.func @transform_3(%arg0: i32, %arg1: i32) -> (i32, i32, i32) {
    %c0_i32 = arith.constant 0 : i32
    %c0_i32_0 = arith.constant 0 : i32
    %c0_i32_1 = arith.constant 0 : i32
    return %arg0, %c0_i32, %c0_i32_0 : i32, i32, i32
  }
  func.func @transform_4(%arg0: i32, %arg1: i32) -> (i32, i32, i32) {
    %c0_i32 = arith.constant 0 : i32
    %c0_i32_0 = arith.constant 0 : i32
    return %arg0, %arg1, %c0_i32 : i32, i32, i32
  }
}

</mosaic_0001>

<llo_original>
// kernel: tpu_custom_call.1
$region0: #{tpu_custom_call.1}
  #allocation0 [shape = 'u32[]', space=smem, size = 0x4, offset = 0x4, fixed_abs, tag = 'smem constant byte address 0x4 - core index']
  #allocation1 [shape = 'u32[72,128]{1,0:T(1,128)}', space=vmem, size = 0x9000, scoped, tag = 'internal scratch']
  #allocation2 [shape = 'bf16[32,128]{1,0:T(8,128)(2,1)}', space=vmem, size = 0x2000, scoped, tag = 'scratch operand']
  #allocation3 [shape = 'bf16[32,128]{1,0:T(8,128)(2,1)}', space=vmem, size = 0x2000, scoped, tag = 'scratch operand']
  #allocation4 [shape = 'bf16[32,128]{1,0:T(8,128)(2,1)}', space=vmem, size = 0x2000, scoped, tag = 'scratch operand']
  %s0 = inlined_call_operand.hbm [shape: bf16[32,32], index: 0, kind: input, shape index: {}]
  %s1 = inlined_call_operand.hbm [shape: bf16[32,128], index: 1, kind: input, shape index: {}]
  %s2 = inlined_call_operand.hbm [shape: bf16[3,128,128], index: 2, kind: input, shape index: {}]
  %s3 = inlined_call_operand.hbm [shape: f32[3,1,128], index: 3, kind: input, shape index: {}]
  %s4 = inlined_call_operand.hbm [shape: f32[3,32,128], index: 4, kind: output, shape index: {}]
  %s5 = sld [smem:[#allocation0]]
  $region77: #{tpu_custom_call.1} parent=0
    _
  %s7 = ssub.s32 1, %s5
  %s8 = scalar_select 0, %s7, %s5
  $region1: #{tpu_custom_call.1} parent=0
    #allocation5 [shape = 'u8[8192]{0}', space=vmem, size = 0x2000, scoped, tag = 'input window, operand 0']
    #allocation6 [shape = 's32[2]{0}', space=sflag, size = 0x8, scoped, tag = 'scoped memory for tpu_custom_call.1']
    #allocation7 [shape = 's32[2]{0}', space=sflag, size = 0x8, scoped, tag = 'scoped memory for tpu_custom_call.1']
    #allocation8 [shape = 'u8[8192]{0}', space=vmem, size = 0x2000, scoped, tag = 'input window, operand 1, single buffered']
    #allocation9 [shape = 's32[1]{0}', space=sflag, size = 0x4, scoped, tag = 'scoped memory for tpu_custom_call.1']
    #allocation10 [shape = 'u8[65536]{0}', space=vmem, size = 0x10000, scoped, tag = 'input window, operand 2']
    #allocation11 [shape = 'u8[1024]{0}', space=vmem, size = 0x400, scoped, tag = 'input window, operand 3']
    #allocation12 [shape = 'u8[16384]{0}', space=vmem, size = 0x4000, scoped, tag = 'output window, operand 0']
    %9 = vsyncpa [#allocation6], 0
    %s10 = scalar_lea.sflag [#allocation6], 1
    %11 = vsyncpa %s10, 0
    %12 = vsyncpa [#allocation9], 0
    %13 = vsyncpa [#allocation7], 0
    %s14 = scalar_lea.sflag [#allocation7], 1
    %15 = vsyncpa %s14, 0
    loop: start=0, step=1, limit=8
    $region2: #{tpu_custom_call.1} parent=1 // loop_pre_header
      _
    $region3: #{tpu_custom_call.1} parent=1 // loop_header
      %s17 = sphi 0, %s21
      %p18 = scmp.ge.s32.totalorder %s17, 8
      %s24 = sphi 0, %s36
      %s25 = sphi 0, %s32
      %s26 = sphi 0, %s24
      %s27 = sphi 0, %s25
      %s28 = sphi 0, %s26
      %s29 = sphi 0, %s27
      %s39 = sphi 0, %s41
      %s42 = sphi 0, %s39
      %s43 = sphi 0, %s42
      %s59 = sphi 0, %s43
      %s63 = sphi 0, %s63
      %s65 = sphi 0, %s63
      %s66 = sphi 0, %s65
      %s80 = sphi 0, %s66
      %s86 = sphi 0, %s88
      %s89 = sphi 0, %s86
      %s90 = sphi 0, %s89
      %s106 = sphi 0, %s90
      %s112 = sphi 0, %s114
      %s115 = sphi 0, %s112
      %s116 = sphi 0, %s115
      %s132 = sphi 0, %s116
      %s140 = sphi 0, %s142
      %s143 = sphi 0, %s140
      %s144 = sphi 0, %s143
      %s160 = sphi 0, %s144
    $region4: #{tpu_custom_call.1} parent=1 // loop_header_branch
      %20 = sbr.rel (%p18) target = $region8
    $region5: #{tpu_custom_call.1} parent=1 // loop_body
      %s22 = ssub.s32 %s17, 1
      %s23 = ssub.s32 %s17, 2
      %s30 = sadd.s32 1, %s25
      %p31 = scmp.ge.s32.totalorder %s30, 2
      %s32 = scalar_select %p31, 0, %s30
      %s33 = sadd.s32 1, %s24
      %s34 = scalar_select %p31, %s33, %s24
      %p35 = scmp.ge.s32.totalorder %s34, 3
      %s36 = scalar_select %p35, 0, %s34
      %s37 = ssub.s32 %s25, %s32
      %p38 = scmp.eq.s32.totalorder %s37, 0
      %s40 = sadd.s32 %s39, 1
      %s41 = scalar_select %p38, %s39, %s40
      %p44 = pneg %p38
      %p45 = scmp.eq.s32.totalorder %s17, 5
      %p46 = por %p44, %p45
      %p47 = scmp.ne.s32.totalorder %s39, %s42
      %p48 = scmp.eq.s32.totalorder %s17, 0
      %p49 = por %p47, %p48
      %p50 = scmp.ne.s32.totalorder %s39, %s42
      %p51 = scmp.eq.s32.totalorder %s22, 5
      %p52 = por %p50, %p51
      %p53 = scmp.ne.s32.totalorder %s42, %s43
      %p54 = scmp.eq.s32.totalorder %s22, 0
      %p55 = por %p53, %p54
      %p56 = scmp.ne.s32.totalorder %s42, %s43
      %p57 = scmp.eq.s32.totalorder %s23, 5
      %p58 = por %p56, %p57
      %p60 = scmp.ne.s32.totalorder %s43, %s59
      %p61 = scmp.eq.s32.totalorder %s23, 0
      %p62 = por %p60, %p61
      %s64 = sadd.s32 %s63, 1
      %p67 = scmp.eq.s32.totalorder %s17, 5
      %p68 = scmp.ne.s32.totalorder %s63, %s65
      %p69 = scmp.eq.s32.totalorder %s17, 0
      %p70 = por %p68, %p69
      %p71 = scmp.ne.s32.totalorder %s63, %s65
      %p72 = scmp.eq.s32.totalorder %s22, 5
      %p73 = por %p71, %p72
      %p74 = scmp.ne.s32.totalorder %s65, %s66
      %p75 = scmp.eq.s32.totalorder %s22, 0
      %p76 = por %p74, %p75
      %p77 = scmp.ne.s32.totalorder %s65, %s66
      %p78 = scmp.eq.s32.totalorder %s23, 5
      %p79 = por %p77, %p78
      %p81 = scmp.ne.s32.totalorder %s66, %s80
      %p82 = scmp.eq.s32.totalorder %s23, 0
      %p83 = por %p81, %p82
      %s84 = ssub.s32 %s24, %s36
      %p85 = scmp.eq.s32.totalorder %s84, 0
      %s87 = sadd.s32 %s86, 1
      %s88 = scalar_select %p85, %s86, %s87
      %p91 = pneg %p85
      %p92 = scmp.eq.s32.totalorder %s17, 5
      %p93 = por %p91, %p92
      %p94 = scmp.ne.s32.totalorder %s86, %s89
      %p95 = scmp.eq.s32.totalorder %s17, 0
      %p96 = por %p94, %p95
      %p97 = scmp.ne.s32.totalorder %s86, %s89
      %p98 = scmp.eq.s32.totalorder %s22, 5
      %p99 = por %p97, %p98
      %p100 = scmp.ne.s32.totalorder %s89, %s90
      %p101 = scmp.eq.s32.totalorder %s22, 0
      %p102 = por %p100, %p101
      %p103 = scmp.ne.s32.totalorder %s89, %s90
      %p104 = scmp.eq.s32.totalorder %s23, 5
      %p105 = por %p103, %p104
      %p107 = scmp.ne.s32.totalorder %s90, %s106
      %p108 = scmp.eq.s32.totalorder %s23, 0
      %p109 = por %p107, %p108
      %s110 = ssub.s32 %s24, %s36
      %p111 = scmp.eq.s32.totalorder %s110, 0
      %s113 = sadd.s32 %s112, 1
      %s114 = scalar_select %p111, %s112, %s113
      %p117 = pneg %p111
      %p118 = scmp.eq.s32.totalorder %s17, 5
      %p119 = por %p117, %p118
      %p120 = scmp.ne.s32.totalorder %s112, %s115
      %p121 = scmp.eq.s32.totalorder %s17, 0
      %p122 = por %p120, %p121
      %p123 = scmp.ne.s32.totalorder %s112, %s115
      %p124 = scmp.eq.s32.totalorder %s22, 5
      %p125 = por %p123, %p124
      %p126 = scmp.ne.s32.totalorder %s115, %s116
      %p127 = scmp.eq.s32.totalorder %s22, 0
      %p128 = por %p126, %p127
      %p129 = scmp.ne.s32.totalorder %s115, %s116
      %p130 = scmp.eq.s32.totalorder %s23, 5
      %p131 = por %p129, %p130
      %p133 = scmp.ne.s32.totalorder %s116, %s132
      %p134 = scmp.eq.s32.totalorder %s23, 0
      %p135 = por %p133, %p134
      %s136 = ssub.s32 %s24, %s36
      %s137 = ssub.s32 %s25, %s32
      %s138 = sor.u32 %s136, %s137
      %p139 = scmp.eq.s32.totalorder %s138, 0
      %s141 = sadd.s32 %s140, 1
      %s142 = scalar_select %p139, %s140, %s141
      %p145 = pneg %p139
      %p146 = scmp.eq.s32.totalorder %s17, 5
      %p147 = por %p145, %p146
      %p148 = scmp.ne.s32.totalorder %s140, %s143
      %p149 = scmp.eq.s32.totalorder %s17, 0
      %p150 = por %p148, %p149
      %p151 = scmp.ne.s32.totalorder %s140, %s143
      %p152 = scmp.eq.s32.totalorder %s22, 5
      %p153 = por %p151, %p152
      %p154 = scmp.ne.s32.totalorder %s143, %s144
      %p155 = scmp.eq.s32.totalorder %s22, 0
      %p156 = por %p154, %p155
      %p157 = scmp.ne.s32.totalorder %s143, %s144
      %p158 = scmp.eq.s32.totalorder %s23, 5
      %p159 = por %p157, %p158
      %p161 = scmp.ne.s32.totalorder %s144, %s160
      %p162 = scmp.eq.s32.totalorder %s23, 0
      %p163 = por %p161, %p162
      %p164 = scmp.le.s32.totalorder 1, %s17
      %p165 = scmp.lt.s32.totalorder %s17, 7
      %p166 = pnand %p164, %p165
      %p167 = pneg %p166
      // Predicated region
      $region9: #{tpu_custom_call.1} parent=5 // pred_check
        _
      $region10: #{tpu_custom_call.1} parent=5 // pred_check_branch
        %169 = sbr.rel (%p166) target = $region12
      $region11: #{tpu_custom_call.1} parent=5 // pred_region
        %s170 = ssub.s32 %s17, 1
        // Predicated region
        $region13: #{tpu_custom_call.1} parent=11 // pred_check
          %p171 = pneg %p76
        $region14: #{tpu_custom_call.1} parent=11 // pred_check_branch
          %173 = sbr.rel (%p171) target = $region16
        $region15: #{tpu_custom_call.1} parent=11 // pred_region
          %175 = vsyncadd [#allocation9], 0
          %s176 = sshll.u32 %s1, 4
          %s177 = int_to_ptr.hbm [resolvable:$true] %s176
          %s178 = sshll.u32 [#allocation8], 4
          %s179 = int_to_ptr.vmem [resolvable:$true] %s178
          %184 = dma.hbm_to_vmem [thread:$0]  %s177, 256, %s179, [#allocation9], 64, 64, 4
        $region16: #{tpu_custom_call.1} parent=11 // pred_fallthru
          _
      $region12: #{tpu_custom_call.1} parent=5 // pred_fallthru
        _
      %p185 = scmp.lt.s32.totalorder %s17, 6
      // Predicated region
      $region17: #{tpu_custom_call.1} parent=5 // pred_check
        %p186 = pneg %p185
      $region18: #{tpu_custom_call.1} parent=5 // pred_check_branch
        %188 = sbr.rel (%p186) target = $region20
      $region19: #{tpu_custom_call.1} parent=5 // pred_region
        // Predicated region
        $region21: #{tpu_custom_call.1} parent=19 // pred_check
          %p189 = pneg %p49
        $region22: #{tpu_custom_call.1} parent=19 // pred_check_branch
          %191 = sbr.rel (%p189) target = $region24
        $region23: #{tpu_custom_call.1} parent=19 // pred_region
          %s192 = sand.u32 %s17, 1
          %s193 = scalar_lea.sflag [#allocation6], %s192
          %s194 = sand.u32 %s39, 1
          %s195 = smul.addr %s194, 8
          %s196 = scalar_lea.vmem [#allocation5], %s195
          %s197 = smul.u32 2, %s25
          %199 = vsyncadd %s193, 0
          %s200 = smul.addr %s197, 4
          %s201 = scalar_lea.hbm %s0, %s200
          %s202 = sshll.u32 %s201, 4
          %s203 = int_to_ptr.hbm [resolvable:$true] %s202
          %s204 = sshll.u32 %s196, 4
          %s205 = int_to_ptr.vmem [resolvable:$true] %s204
          %210 = dma.hbm_to_vmem [thread:$0]  %s203, 128, %s205, %s193, 64, 64, 4
        $region24: #{tpu_custom_call.1} parent=19 // pred_fallthru
          _
        // Predicated region
        $region25: #{tpu_custom_call.1} parent=19 // pred_check
          %p211 = pneg %p96
        $region26: #{tpu_custom_call.1} parent=19 // pred_check_branch
          %213 = sbr.rel (%p211) target = $region28
        $region27: #{tpu_custom_call.1} parent=19 // pred_region
          %s214 = sand.u32 %s17, 1
          %s215 = scalar_lea.sflag [#allocation6], %s214
          %s216 = sand.u32 %s86, 1
          %s217 = smul.addr %s216, 64
          %s218 = scalar_lea.vmem [#allocation10], %s217
          %220 = vsyncadd %s215, 0
          %s221 = smul.addr %s24, 16
          %s222 = smul.addr %s221, 4
          %s223 = scalar_lea.hbm %s2, %s222
          %s224 = sshll.u32 %s223, 4
          %s225 = int_to_ptr.hbm [resolvable:$true] %s224
          %s226 = sshll.u32 %s218, 4
          %s227 = int_to_ptr.vmem [resolvable:$true] %s226
          %232 = dma.hbm_to_vmem [thread:$0]  %s225, 1024, %s227, %s215, 64, 64, 4
        $region28: #{tpu_custom_call.1} parent=19 // pred_fallthru
          _
        // Predicated region
        $region29: #{tpu_custom_call.1} parent=19 // pred_check
          %p233 = pneg %p122
        $region30: #{tpu_custom_call.1} parent=19 // pred_check_branch
          %235 = sbr.rel (%p233) target = $region32
        $region31: #{tpu_custom_call.1} parent=19 // pred_region
          %s236 = sand.u32 %s17, 1
          %s237 = scalar_lea.sflag [#allocation6], %s236
          %s238 = sand.u32 %s112, 1
          %s239 = scalar_lea.vmem [#allocation11], %s238
          %241 = vsyncadd %s237, 0
          %s242 = scalar_lea.hbm %s3, %s24
          %s244 = sshll.u32 %s242, 4
          %s245 = int_to_ptr.hbm [resolvable:$true] %s244
          %s246 = sshll.u32 %s239, 4
          %s247 = int_to_ptr.vmem [resolvable:$true] %s246
          %249 = dma.hbm_to_vmem [thread:$0]  %s245, 16, %s247, %s237
        $region32: #{tpu_custom_call.1} parent=19 // pred_fallthru
          _
      $region20: #{tpu_custom_call.1} parent=5 // pred_fallthru
        _
      %p250 = scmp.le.s32.totalorder 1, %s17
      %p251 = scmp.lt.s32.totalorder %s17, 7
      %p252 = pnand %p250, %p251
      %p253 = pneg %p252
      // Predicated region
      $region33: #{tpu_custom_call.1} parent=5 // pred_check
        _
      $region34: #{tpu_custom_call.1} parent=5 // pred_check_branch
        %255 = sbr.rel (%p252) target = $region36
      $region35: #{tpu_custom_call.1} parent=5 // pred_region
        %s256 = ssub.s32 %s17, 1
        %s257 = sand.u32 %s22, 1
        %s258 = scalar_lea.sflag [#allocation6], %s257
        %s259 = sand.u32 %s42, 1
        %s260 = smul.addr %s259, 8
        %s261 = scalar_lea.vmem [#allocation5], %s260
        // Predicated region
        $region37: #{tpu_custom_call.1} parent=35 // pred_check
          %p262 = pneg %p55
        $region38: #{tpu_custom_call.1} parent=35 // pred_check_branch
          %264 = sbr.rel (%p262) target = $region40
        $region39: #{tpu_custom_call.1} parent=35 // pred_region
          %266 = dma.done %s258, 128
        $region40: #{tpu_custom_call.1} parent=35 // pred_fallthru
          _
        // Predicated region
        $region41: #{tpu_custom_call.1} parent=35 // pred_check
          %p267 = pneg %p76
        $region42: #{tpu_custom_call.1} parent=35 // pred_check_branch
          %269 = sbr.rel (%p267) target = $region44
        $region43: #{tpu_custom_call.1} parent=35 // pred_region
          %271 = dma.done [#allocation9], 256
        $region44: #{tpu_custom_call.1} parent=35 // pred_fallthru
          _
        %s272 = sand.u32 %s22, 1
        %s273 = scalar_lea.sflag [#allocation6], %s272
        %s274 = sand.u32 %s89, 1
        %s275 = smul.addr %s274, 64
        %s276 = scalar_lea.vmem [#allocation10], %s275
        // Predicated region
        $region45: #{tpu_custom_call.1} parent=35 // pred_check
          %p277 = pneg %p102
        $region46: #{tpu_custom_call.1} parent=35 // pred_check_branch
          %279 = sbr.rel (%p277) target = $region48
        $region47: #{tpu_custom_call.1} parent=35 // pred_region
          %281 = dma.done %s273, 1024
        $region48: #{tpu_custom_call.1} parent=35 // pred_fallthru
          _
        %s282 = sand.u32 %s22, 1
        %s283 = scalar_lea.sflag [#allocation6], %s282
        %s284 = sand.u32 %s115, 1
        %s285 = scalar_lea.vmem [#allocation11], %s284
        // Predicated region
        $region49: #{tpu_custom_call.1} parent=35 // pred_check
          %p286 = pneg %p128
        $region50: #{tpu_custom_call.1} parent=35 // pred_check_branch
          %288 = sbr.rel (%p286) target = $region52
        $region51: #{tpu_custom_call.1} parent=35 // pred_region
          %290 = dma.done %s283, 16
        $region52: #{tpu_custom_call.1} parent=35 // pred_fallthru
          _
        %s291 = sand.u32 %s22, 1
        %s292 = scalar_lea.sflag [#allocation6], %s291
        %s293 = sand.u32 %s42, 1
        %s294 = smul.addr %s293, 8
        %s295 = scalar_lea.vmem [#allocation5], %s294
        %p296 = pneg %p55
        %p297 = pneg %p52
        %p298 = pneg %p76
        %p299 = pneg %p73
        %s300 = sand.u32 %s22, 1
        %s301 = scalar_lea.sflag [#allocation6], %s300
        %s302 = sand.u32 %s89, 1
        %s303 = smul.addr %s302, 64
        %s304 = scalar_lea.vmem [#allocation10], %s303
        %p305 = pneg %p102
        %p306 = pneg %p99
        %s307 = sand.u32 %s22, 1
        %s308 = scalar_lea.sflag [#allocation6], %s307
        %s309 = sand.u32 %s115, 1
        %s310 = scalar_lea.vmem [#allocation11], %s309
        %p311 = pneg %p128
        %p312 = pneg %p125
        %p313 = pneg %p156
        %p314 = pneg %p153
        %s315 = sand.u32 %s143, 1
        %s316 = scalar_lea.sflag [#allocation7], %s315
        %s317 = sand.u32 %s143, 1
        %s318 = smul.addr %s317, 16
        %s319 = scalar_lea.vmem [#allocation12], %s318
        %s320 = smul.u32 2, %s27
        %s321 = smul.u32 2, %s27
        %p323 = scmp.eq.s32.totalorder %s27, 0
        // Predicated region
        $region53: #{tpu_custom_call.1} parent=35 // pred_check
          %p324 = pneg %p323
        $region54: #{tpu_custom_call.1} parent=35 // pred_check_branch
          %326 = sbr.rel (%p324) target = $region56
        $region55: #{tpu_custom_call.1} parent=35 // pred_region
          %p327 = scmp.lt.s32.totalorder %s26, 0
          %s328 = ssub.s32 0, %s26
          %s329 = scalar_select %p327, %s328, %s26
          %s330 = sand.u32 %s329, 1
          %s331 = ssub.s32 0, %s330
          %s332 = scalar_select %p327, %s331, %s330
          %p333 = scmp.ne.s32.totalorder %s332, 0
          %p334 = scmp.lt.s32.totalorder %s332, 0
          %p335 = pnand %p334, %p333
          %p336 = pneg %p335
          %s337 = sadd.s32 %s332, 2
          %s338 = scalar_select %p336, %s337, %s332
          %p339 = scmp.eq.s32.totalorder %s338, 1
          %v340 = vld [vmem:[#allocation2] sm:$0xf]
          %v341 = vld [vmem:[#allocation2 + $0x4] sm:$0xf]
          %v342 = vld [vmem:[#allocation2 + $0x8] sm:$0xf]
          %v343 = vld [vmem:[#allocation2 + $0xc] sm:$0xf]
          %v344 = vld [vmem:[#allocation3] sm:$0xf]
          %v345 = vld [vmem:[#allocation3 + $0x4] sm:$0xf]
          %v346 = vld [vmem:[#allocation3 + $0x8] sm:$0xf]
          %v347 = vld [vmem:[#allocation3 + $0xc] sm:$0xf]
          %s348 = scalar_select %p339, 1, 0
          %v349 = vstv %s348
          %vm350 = vcmp.eq.s32.totalorder %v349, 1
          %v351 = vsel %vm350, %v340, %v344
          %v352 = vsel %vm350, %v341, %v345
          %v353 = vsel %vm350, %v342, %v346
          %v354 = vsel %vm350, %v343, %v347
          %p355 = scmp.eq.s32.totalorder %s26, 0
          %v356 = vld [vmem:[#allocation8] sm:$0xf]
          %v357 = vld [vmem:[#allocation8 + $0x4] sm:$0xf]
          %v358 = vld [vmem:[#allocation8 + $0x8] sm:$0xf]
          %v359 = vld [vmem:[#allocation8 + $0xc] sm:$0xf]
          %s360 = scalar_select %p355, 1, 0
          %v361 = vstv %s360
          %vm362 = vcmp.eq.s32.totalorder %v361, 1
          %v363 = vsel %vm362, %v356, %v351
          %v364 = vsel %vm362, %v357, %v352
          %v365 = vsel %vm362, %v358, %v353
          %v366 = vsel %vm362, %v359, %v354
          %v367 = vld [vmem:[%s276] sm:$0xf]
          %v368 = vld [vmem:[%s276 + $0x4] sm:$0xf]
          %v369 = vld [vmem:[%s276 + $0x8] sm:$0xf]
          %v370 = vld [vmem:[%s276 + $0xc] sm:$0xf]
          %v371 = vld [vmem:[%s276 + $0x10] sm:$0xf]
          %v372 = vld [vmem:[%s276 + $0x14] sm:$0xf]
          %v373 = vld [vmem:[%s276 + $0x18] sm:$0xf]
          %v374 = vld [vmem:[%s276 + $0x1c] sm:$0xf]
          %v375 = vld [vmem:[%s276 + $0x20] sm:$0xf]
          %v376 = vld [vmem:[%s276 + $0x24] sm:$0xf]
          %v377 = vld [vmem:[%s276 + $0x28] sm:$0xf]
          %v378 = vld [vmem:[%s276 + $0x2c] sm:$0xf]
          %v379 = vld [vmem:[%s276 + $0x30] sm:$0xf]
          %v380 = vld [vmem:[%s276 + $0x34] sm:$0xf]
          %v381 = vld [vmem:[%s276 + $0x38] sm:$0xf]
          %v382 = vld [vmem:[%s276 + $0x3c] sm:$0xf]
          %v387 = vunpack.c.l.b16 %v363
          %v388 = vunpack.c.l.b16 %v364
          %v389 = vunpack.c.l.b16 %v365
          %v390 = vunpack.c.l.b16 %v366
          %v391 = vpack.c.b16 %v388, %v387
          %v392 = vpack.c.b16 %v390, %v389
          %v411 = vunpack.c.l.b16 %v367
          %v412 = vunpack.c.l.b16 %v368
          %v413 = vunpack.c.l.b16 %v369
          %v414 = vunpack.c.l.b16 %v370
          %v415 = vunpack.c.l.b16 %v371
          %v416 = vunpack.c.l.b16 %v372
          %v417 = vunpack.c.l.b16 %v373
          %v418 = vunpack.c.l.b16 %v374
          %v419 = vunpack.c.l.b16 %v375
          %v420 = vunpack.c.l.b16 %v376
          %v421 = vunpack.c.l.b16 %v377
          %v422 = vunpack.c.l.b16 %v378
          %v423 = vunpack.c.l.b16 %v379
          %v424 = vunpack.c.l.b16 %v380
          %v425 = vunpack.c.l.b16 %v381
          %v426 = vunpack.c.l.b16 %v382
          %v427 = vpack.c.b16 %v412, %v411
          %v428 = vpack.c.b16 %v414, %v413
          %v429 = vpack.c.b16 %v416, %v415
          %v430 = vpack.c.b16 %v418, %v417
          %v431 = vpack.c.b16 %v420, %v419
          %v432 = vpack.c.b16 %v422, %v421
          %v433 = vpack.c.b16 %v424, %v423
          %v434 = vpack.c.b16 %v426, %v425
          %443 = vmatpush.bf16.msra.mxu0 %v434
          %444 = vmatpush.bf16.msra.mxu0 %v433
          %445 = vmatpush.bf16.msra.mxu0 %v432
          %446 = vmatpush.bf16.msra.mxu0 %v431
          %447 = vmatpush.bf16.msra.mxu0 %v430
          %448 = vmatpush.bf16.msra.mxu0 %v429
          %449 = vmatpush.bf16.msra.mxu0 %v428
          %450 = vmatpush.bf16.msra.mxu0 %v427
          %451 = vmatmul.bf16.gmra.mxu0 %v391
          %v452 = vpop.f32.mrf.mxu0
          %v453 = vadd.f32 0.0, %v452
          %v454 = vpop.f32.mrf.mxu0
          %v455 = vadd.f32 0.0, %v454
          %456 = vmatmul.bf16.gmra.mxu0 %v392
          %v457 = vpop.f32.mrf.mxu0
          %v458 = vadd.f32 0.0, %v457
          %v459 = vpop.f32.mrf.mxu0
          %v460 = vadd.f32 0.0, %v459
          %461 = vdwg.mxu0
          %v462 = vpack.c.bf16 %v453, %v453
          %v463 = vpack.c.bf16 %v455, %v455
          %v464 = vpack.c.bf16 %v458, %v458
          %v465 = vpack.c.bf16 %v460, %v460
          %466 = vst [vmem:[#allocation4] sm:$0xf] %v462
          %467 = vst [vmem:[#allocation4 + $0x4] sm:$0xf] %v463
          %468 = vst [vmem:[#allocation4 + $0x8] sm:$0xf] %v464
          %469 = vst [vmem:[#allocation4 + $0xc] sm:$0xf] %v465
        $region56: #{tpu_custom_call.1} parent=35 // pred_fallthru
          _
        %v470 = vld [vmem:[%s261] sm:$0xf]
        %v471 = vld [vmem:[%s261 + $0x4] sm:$0xf]
        %v472 = vld [vmem:[#allocation4] sm:$0xf]
        %v473 = vld [vmem:[#allocation4 + $0x4] sm:$0xf]
        %v474 = vld [vmem:[#allocation4 + $0x8] sm:$0xf]
        %v475 = vld [vmem:[#allocation4 + $0xc] sm:$0xf]
        %v476 = vld [vmem:[%s285] sm:$0x1]
        %v478 = vperm.slane %v476, 0
        %v482 = vunpack.c.l.b16 %v470
        %v483 = vunpack.c.l.b16 %v471
        %v484 = vpack.c.b16 %v483, %v482
        %v489 = vunpack.c.l.b16 %v472
        %v490 = vunpack.c.l.b16 %v473
        %v491 = vunpack.c.l.b16 %v474
        %v492 = vunpack.c.l.b16 %v475
        %v493 = vpack.c.b16 %v490, %v489
        %v494 = vpack.c.b16 %v492, %v491
        %vm497 = vcmask 261120
        %v499 = vsel %vm497, %v484, 0
        %501 = vmatpush.bf16.msra.mxu0 0
        %502 = vmatpush.bf16.msra.mxu0 0
        %503 = vmatpush.bf16.msra.mxu0 0
        %504 = vmatpush.bf16.msra.mxu0 0
        %505 = vmatpush.bf16.msra.mxu0 0
        %506 = vmatpush.bf16.msra.mxu0 0
        %507 = vmatpush.bf16.msra.mxu0 %v494
        %508 = vmatpush.bf16.msra.mxu0 %v493
        %509 = vmatmul.bf16.gmra.mxu0 %v499
        %v510 = vpop.f32.mrf.mxu0
        %v511 = vadd.f32 %v478, %v510
        %v512 = vpop.f32.mrf.mxu0
        %v513 = vadd.f32 %v478, %v512
        %514 = vdwg.mxu0
        %v515 = vtanh.pop %v511
        %v516 = vtanh.pop %v513
        %517 = vst [vmem:[%s319] sm:$0xff] %v515
        %518 = vst [vmem:[%s319 + $0x8] sm:$0xff] %v516
        %v519 = vpack.c.bf16 %v515, %v515
        %v520 = vpack.c.bf16 %v516, %v516
        %s521 = smul.u32 %s27, 16
        %p522 = scmp.lt.s32.totalorder %s26, 0
        %s523 = ssub.s32 0, %s26
        %s524 = scalar_select %p522, %s523, %s26
        %s525 = sand.u32 %s524, 1
        %s526 = ssub.s32 0, %s525
        %s527 = scalar_select %p522, %s526, %s525
        %p528 = scmp.ne.s32.totalorder %s527, 0
        %p529 = scmp.lt.s32.totalorder %s527, 0
        %p530 = pnand %p529, %p528
        %p531 = pneg %p530
        %s532 = sadd.s32 %s527, 2
        %s533 = scalar_select %p531, %s532, %s527
        %p534 = scmp.eq.s32.totalorder %s533, 0
        // Predicated region
        $region57: #{tpu_custom_call.1} parent=35 // pred_check
          %p535 = pneg %p534
        $region58: #{tpu_custom_call.1} parent=35 // pred_check_branch
          %537 = sbr.rel (%p535) target = $region60
        $region59: #{tpu_custom_call.1} parent=35 // pred_region
          %s538 = sshra.s32 %s521, 3
          %s539 = sand.u32 %s521, 7
          %s540 = smul.addr %s538, 4
          %s541 = scalar_lea.vmem [#allocation2], %s540
          %542 = vst [vmem:[%s541] sm:$0xf] %v519
          %543 = vst [vmem:[%s541 + $0x4] sm:$0xf] %v520
        $region60: #{tpu_custom_call.1} parent=35 // pred_fallthru
          _
        %p544 = scmp.eq.s32.totalorder %s533, 1
        // Predicated region
        $region61: #{tpu_custom_call.1} parent=35 // pred_check
          %p545 = pneg %p544
        $region62: #{tpu_custom_call.1} parent=35 // pred_check_branch
          %547 = sbr.rel (%p545) target = $region64
        $region63: #{tpu_custom_call.1} parent=35 // pred_region
          %s548 = sshra.s32 %s521, 3
          %s549 = sand.u32 %s521, 7
          %s550 = smul.addr %s548, 4
          %s551 = scalar_lea.vmem [#allocation3], %s550
          %552 = vst [vmem:[%s551] sm:$0xf] %v519
          %553 = vst [vmem:[%s551 + $0x4] sm:$0xf] %v520
        $region64: #{tpu_custom_call.1} parent=35 // pred_fallthru
          _
        %s554 = sand.u32 %s143, 1
        %s555 = scalar_lea.sflag [#allocation7], %s554
        %s556 = sand.u32 %s143, 1
        %s557 = smul.addr %s556, 16
        %s558 = scalar_lea.vmem [#allocation12], %s557
        // Predicated region
        $region65: #{tpu_custom_call.1} parent=35 // pred_check
          %p559 = pneg %p153
        $region66: #{tpu_custom_call.1} parent=35 // pred_check_branch
          %561 = sbr.rel (%p559) target = $region68
        $region67: #{tpu_custom_call.1} parent=35 // pred_region
          %s562 = smul.u32 2, %s27
          %564 = vsyncadd %s555, 0
          %s565 = smul.addr %s26, 4
          %s566 = sadd.s32 %s562, %s565
          %s567 = smul.addr %s566, 8
          %s568 = scalar_lea.hbm %s4, %s567
          %s569 = sshll.u32 %s558, 4
          %s570 = int_to_ptr.vmem [resolvable:$true] %s569
          %s571 = sshll.u32 %s568, 4
          %s572 = int_to_ptr.hbm [resolvable:$true] %s571
          %577 = dma.vmem_to_hbm [thread:$0]  %s570, 256, %s572, %s555, 128, 128, 8
        $region68: #{tpu_custom_call.1} parent=35 // pred_fallthru
          _
      $region36: #{tpu_custom_call.1} parent=5 // pred_fallthru
        _
      %p578 = scmp.le.s32.totalorder 2, %s17
      // Predicated region
      $region69: #{tpu_custom_call.1} parent=5 // pred_check
        %p579 = pneg %p578
      $region70: #{tpu_custom_call.1} parent=5 // pred_check_branch
        %581 = sbr.rel (%p579) target = $region72
      $region71: #{tpu_custom_call.1} parent=5 // pred_region
        %s582 = ssub.s32 %s17, 2
        // Predicated region
        $region73: #{tpu_custom_call.1} parent=71 // pred_check
          %p583 = pneg %p159
        $region74: #{tpu_custom_call.1} parent=71 // pred_check_branch
          %585 = sbr.rel (%p583) target = $region76
        $region75: #{tpu_custom_call.1} parent=71 // pred_region
          %s586 = sand.u32 %s144, 1
          %s587 = scalar_lea.sflag [#allocation7], %s586
          %s588 = sand.u32 %s144, 1
          %s589 = smul.addr %s588, 16
          %s590 = scalar_lea.vmem [#allocation12], %s589
          %592 = dma.done %s587, 256
        $region76: #{tpu_custom_call.1} parent=71 // pred_fallthru
          _
      $region72: #{tpu_custom_call.1} parent=5 // pred_fallthru
        _
    $region6: #{tpu_custom_call.1} parent=1 // loop_footer
      %s21 = sadd.s32 1, %s17
    $region7: #{tpu_custom_call.1} parent=1 // loop_footer_branch
      %16 = sbr.rel target = $region3
    $region8: #{tpu_custom_call.1} parent=1 // loop_exit
      _
    %593 = vsyncpa [#allocation6], 1
    %s594 = scalar_lea.sflag [#allocation6], 1
    %595 = vsyncpa %s594, 1
    %596 = vsyncpa [#allocation9], 1
    %597 = vsyncpa [#allocation7], 1
    %s598 = scalar_lea.sflag [#allocation7], 1
    %599 = vsyncpa %s598, 1

</llo_original>
